<compile_context>
chip_gen: v5e
topology: v5e:2x2
jax: 0.10.0
libtpu: 0.0.40
codegen_flags: <defaults>
</compile_context>

<pallas_src>
import functools
import math

import jax
import jax.numpy as jnp
from jax import lax
from jax.experimental import pallas as pl
from jax.experimental.pallas import tpu as pltpu


def _sdpa_kernel(q_ref, k_ref, v_ref, out_ref, score_ref, *, scale):
    # Blocks: q/out (1,1,TQ,D), k/v (1,1,L,D), score (1,1,TQ,L); [0, 0] squeezes the leading
    # singleton (batch, head) dims.
    q = q_ref[0, 0] * jnp.asarray(scale, q_ref.dtype)       # 1/sqrt(D) folded into Q (TQ, D)
    k = k_ref[0, 0]                                         # (L, D)
    v = v_ref[0, 0]                                         # (L, D)

    # scores = (q * scale) @ k^T, contracting the last dims directly (no transpose relayout).
    scores = lax.dot_general(q, k, (((1,), (1,)), ((), ())),
                             preferred_element_type=jnp.float32)   # (TQ, L) f32

    # softmax(dim=-1); exact (TQ, 1) divide — `score` is a returned output.
    m = jnp.max(scores, axis=-1, keepdims=True)
    e = jnp.exp(scores - m)
    p = e * (1.0 / jnp.sum(e, axis=-1, keepdims=True))

    # Cast once, reuse for both the score writeback and the PV matmul.
    p_cast = p.astype(v.dtype)
    ctx = jnp.dot(p_cast, v, preferred_element_type=jnp.float32)

    out_ref[0, 0] = ctx.astype(out_ref.dtype)
    score_ref[0, 0] = p_cast if score_ref.dtype == v.dtype else p.astype(score_ref.dtype)


def _sdpa_masked_kernel(q_ref, k_ref, v_ref, bias_ref, out_ref, score_ref, *, scale):
    q = q_ref[0, 0] * jnp.asarray(scale, q_ref.dtype)       # (TQ, D)
    k = k_ref[0, 0]                                         # (L, D)
    v = v_ref[0, 0]                                         # (L, D)

    scores = lax.dot_general(q, k, (((1,), (1,)), ((), ())),
                             preferred_element_type=jnp.float32)   # (TQ, L) f32
    # masked_fill(mask == 0, -10000) as a single additive VPU pass: bias is 0 / -10000 f32;
    # softmax-identical to overwriting (masked exponents underflow to exactly 0 either way).
    scores = scores + bias_ref[0, 0]

    m = jnp.max(scores, axis=-1, keepdims=True)
    e = jnp.exp(scores - m)
    p = e * (1.0 / jnp.sum(e, axis=-1, keepdims=True))

    p_cast = p.astype(v.dtype)
    ctx = jnp.dot(p_cast, v, preferred_element_type=jnp.float32)

    out_ref[0, 0] = ctx.astype(out_ref.dtype)
    score_ref[0, 0] = p_cast if score_ref.dtype == v.dtype else p.astype(score_ref.dtype)


def _vmem_budget_and_default_block_q():
    """Generation-aware (vmem_limit_bytes, default block_q)."""
    try:
        cap = getattr(pltpu.get_tpu_info(), "vmem_capacity_bytes", None)
    except Exception:                      # non-TPU backend / interpret mode
        cap = None
    if not cap:
        return 48 * 1024 * 1024, 256       # conservative fallback
    if cap >= 100 * 1024 * 1024:           # v5e / v6e: 128 MiB physical per TensorCore
        return 100 * 1024 * 1024, 512
    # v7x: 64 MiB physical — leave headroom for compiler-internal scratch
    return min(52 * 1024 * 1024, (cap * 13) // 16), 256


def scale_dot_product_attention(q, k, v, mask=None, *, block_q=None):
    """Pallas implementation of ScaleDotProductAttention.forward -> (context, score)."""
    B, H, L, D = k.shape
    scale = 1.0 / math.sqrt(D)
    itemsize = jnp.dtype(q.dtype).itemsize

    vmem_limit, default_tq = _vmem_budget_and_default_block_q()
    TQ = min(block_q if block_q is not None else default_tq, L)

    # VMEM guard: shrink the query tile until the double-buffered working set fits the budget.
    def step_bytes(tq):
        b = 2 * tq * D * itemsize                 # q block
        b += 2 * 2 * L * D * itemsize             # resident K and V blocks
        b += 2 * tq * D * itemsize                # ctx out block
        b += 2 * tq * L * itemsize                # score out block
        if mask is not None:
            b += 2 * tq * L * 4                   # f32 additive bias block
        return b

    while TQ > 8 and step_bytes(TQ) > (vmem_limit * 17) // 20:
        TQ = max(8, TQ // 2)
    qn = pl.cdiv(L, TQ)

    out_shape = (
        jax.ShapeDtypeStruct((B, H, L, D), q.dtype),   # context
        jax.ShapeDtypeStruct((B, H, L, L), q.dtype),   # score (the module returns it)
    )
    q_spec = pl.BlockSpec((1, 1, TQ, D), lambda b, h, i: (b, h, i, 0))
    kv_spec = pl.BlockSpec((1, 1, L, D), lambda b, h, i: (b, h, 0, 0))   # resident across i
    out_spec = pl.BlockSpec((1, 1, TQ, D), lambda b, h, i: (b, h, i, 0))
    score_spec = pl.BlockSpec((1, 1, TQ, L), lambda b, h, i: (b, h, i, 0))

    cparams = pltpu.CompilerParams(
        # No accumulation across any grid axis -> all parallel (lets v7x's two TensorCores
        # also shard the query-tile axis when B*H is small/odd; no effect on v5e/v6e).
        dimension_semantics=("parallel", "parallel", "parallel"),
        vmem_limit_bytes=int(vmem_limit),
    )

    flops = 4 * B * H * L * L * D          # QK^T + PV
    trans = B * H * L * L                  # exp
    bytes_accessed = ((q.size + k.size + v.size) * itemsize
                      + B * H * L * D * itemsize + B * H * L * L * itemsize)

    if mask is None:
        cost = pl.CostEstimate(flops=flops, transcendentals=trans,
                               bytes_accessed=bytes_accessed)
        return pl.pallas_call(
            functools.partial(_sdpa_kernel, scale=scale),
            out_shape=out_shape,
            grid_spec=pltpu.PrefetchScalarGridSpec(
                num_scalar_prefetch=0,
                grid=(B, H, qn),
                in_specs=[q_spec, kv_spec, kv_spec],
                out_specs=[out_spec, score_spec],
            ),
            compiler_params=cparams,
            cost_estimate=cost,
        )(q, k, v)

    # Precompute an f32 additive bias (0 where kept, -10000 where mask == 0) in the mask's own
    # broadcast shape (mb, mh, L, L); batch/head broadcasting stays in the index_map so the
    # bias is never materialized at (B, H, L, L).  `mask == 0` is evaluated on the ORIGINAL
    # mask dtype, matching PyTorch's masked_fill even for fractional masks.
    mask = jnp.asarray(mask)
    while mask.ndim < 4:
        mask = mask[None]
    bias = jnp.where(mask == 0, jnp.float32(-10000.0), jnp.float32(0.0))
    mb, mh = int(bias.shape[0]), int(bias.shape[1])
    bias = jnp.broadcast_to(bias, (mb, mh, L, L)).astype(jnp.float32)
    bias_spec = pl.BlockSpec(
        (1, 1, TQ, L),
        lambda b, h, i: (b if mb > 1 else 0, h if mh > 1 else 0, i, 0))

    cost = pl.CostEstimate(flops=flops, transcendentals=trans,
                           bytes_accessed=bytes_accessed + B * H * L * L * 4)
    return pl.pallas_call(
        functools.partial(_sdpa_masked_kernel, scale=scale),
        out_shape=out_shape,
        grid_spec=pltpu.PrefetchScalarGridSpec(
            num_scalar_prefetch=0,
            grid=(B, H, qn),
            in_specs=[q_spec, kv_spec, kv_spec, bias_spec],
            out_specs=[out_spec, score_spec],
        ),
        compiler_params=cparams,
        cost_estimate=cost,
    )(q, k, v, bias)


def _reference(q, k, v, mask=None):
    d = k.shape[-1]
    score = jnp.einsum("bhld,bhmd->bhlm", q, k) / math.sqrt(d)
    if mask is not None:
        score = jnp.where(mask == 0, -10000.0, score)
    score = jax.nn.softmax(score, axis=-1)
    return jnp.einsum("bhlm,bhmd->bhld", score, v), score


if __name__ == "__main__":
    key = jax.random.PRNGKey(0)
    kq, kk, kv = jax.random.split(key, 3)

    B, H, L, D = 2, 4, 8, 32
    q = jax.random.normal(kq, (B, H, L, D), dtype=jnp.float32)
    k = jax.random.normal(kk, (B, H, L, D), dtype=jnp.float32)
    v = jax.random.normal(kv, (B, H, L, D), dtype=jnp.float32)

    TOL = dict(atol=2e-3, rtol=2e-3)

    # 1) mask=None path (the module's default).
    ctx, score = scale_dot_product_attention(q, k, v)
    jax.block_until_ready((ctx, score))
    ref_ctx, ref_score = _reference(q, k, v)
    assert jnp.allclose(ctx, ref_ctx, **TOL)
    assert jnp.allclose(score, ref_score, **TOL)

    # 2) masked path (causal mask broadcast over batch & head via the index_map).
    causal = jnp.tril(jnp.ones((1, 1, L, L), dtype=jnp.int32))
    ctx_m, score_m = scale_dot_product_attention(q, k, v, mask=causal)
    jax.block_until_ready((ctx_m, score_m))
    ref_ctx_m, ref_score_m = _reference(q, k, v, mask=causal)
    assert jnp.allclose(ctx_m, ref_ctx_m, **TOL)
    assert jnp.allclose(score_m, ref_score_m, **TOL)

    # 3) A shape that exercises query tiling with resident K/V (two query tiles per head).
    B2, H2, L2, D2 = 1, 2, 256, 64
    k2a, k2b, k2c = jax.random.split(jax.random.PRNGKey(1), 3)
    q2 = jax.random.normal(k2a, (B2, H2, L2, D2), dtype=jnp.float32)
    k2 = jax.random.normal(k2b, (B2, H2, L2, D2), dtype=jnp.float32)
    v2 = jax.random.normal(k2c, (B2, H2, L2, D2), dtype=jnp.float32)
    ctx2, score2 = scale_dot_product_attention(q2, k2, v2, block_q=128)
    jax.block_until_ready((ctx2, score2))
    ref_ctx2, ref_score2 = _reference(q2, k2, v2)
    assert jnp.allclose(ctx2, ref_ctx2, **TOL)
    assert jnp.allclose(score2, ref_score2, **TOL)

    print("KERNEL_OK")
</pallas_src>

<mosaic_0001>
module attributes {stable_mosaic.version = 11 : i64} {
  func.func @_sdpa_kernel(%arg0: i32, %arg1: i32, %arg2: i32, %arg3: memref<1x1x8x32xf32, #tpu.memory_space<vmem>>, %arg4: memref<1x1x8x32xf32, #tpu.memory_space<vmem>>, %arg5: memref<1x1x8x32xf32, #tpu.memory_space<vmem>>, %arg6: memref<1x1x8x32xf32, #tpu.memory_space<vmem>>, %arg7: memref<1x1x8x8xf32, #tpu.memory_space<vmem>>) attributes {dimension_semantics = [#tpu.dimension_semantics<parallel>, #tpu.dimension_semantics<parallel>, #tpu.dimension_semantics<parallel>], iteration_bounds = array<i64: 2, 4, 1>, scalar_prefetch = 0 : i64, scratch_operands = 0 : i64, tpu.core_type = #tpu.core_type<tc>, window_params = [{transform_indices = @transform_0, window_bounds = array<i64: 1, 1, 8, 32>}, {transform_indices = @transform_1, window_bounds = array<i64: 1, 1, 8, 32>}, {transform_indices = @transform_2, window_bounds = array<i64: 1, 1, 8, 32>}, {transform_indices = @transform_3, window_bounds = array<i64: 1, 1, 8, 32>}, {transform_indices = @transform_4, window_bounds = array<i64: 1, 1, 8, 8>}]} {
    %c0 = arith.constant 0 : index
    %c0_0 = arith.constant 0 : index
    %c0_1 = arith.constant 0 : index
    %c0_2 = arith.constant 0 : index
    %0 = vector.load %arg3[%c0, %c0_0, %c0_1, %c0_2] : memref<1x1x8x32xf32, #tpu.memory_space<vmem>>, vector<1x1x8x32xf32>
    %1 = vector.shape_cast %0 : vector<1x1x8x32xf32> to vector<8x32xf32>
    %cst = arith.constant 0.176776692 : f32
    %2 = vector.broadcast %cst : f32 to vector<8x32xf32>
    %3 = arith.mulf %1, %2 : vector<8x32xf32>
    %c0_3 = arith.constant 0 : index
    %c0_4 = arith.constant 0 : index
    %c0_5 = arith.constant 0 : index
    %c0_6 = arith.constant 0 : index
    %4 = vector.load %arg4[%c0_3, %c0_4, %c0_5, %c0_6] : memref<1x1x8x32xf32, #tpu.memory_space<vmem>>, vector<1x1x8x32xf32>
    %5 = vector.shape_cast %4 : vector<1x1x8x32xf32> to vector<8x32xf32>
    %c0_7 = arith.constant 0 : index
    %c0_8 = arith.constant 0 : index
    %c0_9 = arith.constant 0 : index
    %c0_10 = arith.constant 0 : index
    %6 = vector.load %arg5[%c0_7, %c0_8, %c0_9, %c0_10] : memref<1x1x8x32xf32, #tpu.memory_space<vmem>>, vector<1x1x8x32xf32>
    %7 = vector.shape_cast %6 : vector<1x1x8x32xf32> to vector<8x32xf32>
    %cst_11 = arith.constant dense<0.000000e+00> : vector<8x8xf32>
    %8 = tpu.matmul %3, %5, %cst_11 {dimension_numbers = #tpu.dot_dimension_numbers<[1], [1], [0], [0], [0, 0, 1, 0], [], []>} : vector<8x32xf32>, vector<8x32xf32>, vector<8x8xf32> -> vector<8x8xf32>
    %cst_12 = arith.constant dense<0xFF800000> : vector<8xf32>
    %9 = vector.multi_reduction <maximumf>, %8, %cst_12 [1] : vector<8x8xf32> to vector<8xf32>
    %10 = vector.shape_cast %9 : vector<8xf32> to vector<8x1xf32>
    %11 = vector.broadcast %10 : vector<8x1xf32> to vector<8x8xf32>
    %12 = arith.subf %8, %11 : vector<8x8xf32>
    %13 = math.exp %12 : vector<8x8xf32>
    %cst_13 = arith.constant dense<0.000000e+00> : vector<8xf32>
    %14 = vector.multi_reduction <add>, %13, %cst_13 [1] : vector<8x8xf32> to vector<8xf32>
    %15 = vector.shape_cast %14 : vector<8xf32> to vector<8x1xf32>
    %cst_14 = arith.constant 1.000000e+00 : f32
    %16 = vector.broadcast %cst_14 : f32 to vector<8x1xf32>
    %17 = arith.divf %16, %15 : vector<8x1xf32>
    %18 = vector.broadcast %17 : vector<8x1xf32> to vector<8x8xf32>
    %19 = arith.mulf %13, %18 : vector<8x8xf32>
    %cst_15 = arith.constant dense<0.000000e+00> : vector<8x32xf32>
    %20 = tpu.matmul %19, %7, %cst_15 {dimension_numbers = #tpu.dot_dimension_numbers<[1], [0], [0], [1], [0, 0, 1, 1], [], []>} : vector<8x8xf32>, vector<8x32xf32>, vector<8x32xf32> -> vector<8x32xf32>
    %c0_16 = arith.constant 0 : index
    %c0_17 = arith.constant 0 : index
    %c0_18 = arith.constant 0 : index
    %c0_19 = arith.constant 0 : index
    %21 = vector.load %arg6[%c0_16, %c0_17, %c0_18, %c0_19] : memref<1x1x8x32xf32, #tpu.memory_space<vmem>>, vector<1x1x8x32xf32>
    %22 = vector.shape_cast %21 : vector<1x1x8x32xf32> to vector<8x32xf32>
    %23 = vector.shape_cast %20 : vector<8x32xf32> to vector<1x1x8x32xf32>
    tpu.vector_store %arg6[%c0_16, %c0_17, %c0_18, %c0_19], %23 {strides = array<i32>} : memref<1x1x8x32xf32, #tpu.memory_space<vmem>>, vector<1x1x8x32xf32>,
    %c0_20 = arith.constant 0 : index
    %c0_21 = arith.constant 0 : index
    %c0_22 = arith.constant 0 : index
    %c0_23 = arith.constant 0 : index
    %24 = vector.load %arg7[%c0_20, %c0_21, %c0_22, %c0_23] : memref<1x1x8x8xf32, #tpu.memory_space<vmem>>, vector<1x1x8x8xf32>
    %25 = vector.shape_cast %24 : vector<1x1x8x8xf32> to vector<8x8xf32>
    %26 = vector.shape_cast %19 : vector<8x8xf32> to vector<1x1x8x8xf32>
    tpu.vector_store %arg7[%c0_20, %c0_21, %c0_22, %c0_23], %26 {strides = array<i32>} : memref<1x1x8x8xf32, #tpu.memory_space<vmem>>, vector<1x1x8x8xf32>,
    return
  }
  func.func @transform_0(%arg0: i32, %arg1: i32, %arg2: i32) -> (i32, i32, i32, i32) {
    %c0_i32 = arith.constant 0 : i32
    %c0_i32_0 = arith.constant 0 : i32
    return %arg0, %arg1, %arg2, %c0_i32 : i32, i32, i32, i32
  }
  func.func @transform_1(%arg0: i32, %arg1: i32, %arg2: i32) -> (i32, i32, i32, i32) {
    %c0_i32 = arith.constant 0 : i32
    %c0_i32_0 = arith.constant 0 : i32
    %c0_i32_1 = arith.constant 0 : i32
    return %arg0, %arg1, %c0_i32, %c0_i32_0 : i32, i32, i32, i32
  }
  func.func @transform_2(%arg0: i32, %arg1: i32, %arg2: i32) -> (i32, i32, i32, i32) {
    %c0_i32 = arith.constant 0 : i32
    %c0_i32_0 = arith.constant 0 : i32
    %c0_i32_1 = arith.constant 0 : i32
    return %arg0, %arg1, %c0_i32, %c0_i32_0 : i32, i32, i32, i32
  }
  func.func @transform_3(%arg0: i32, %arg1: i32, %arg2: i32) -> (i32, i32, i32, i32) {
    %c0_i32 = arith.constant 0 : i32
    %c0_i32_0 = arith.constant 0 : i32
    return %arg0, %arg1, %arg2, %c0_i32 : i32, i32, i32, i32
  }
  func.func @transform_4(%arg0: i32, %arg1: i32, %arg2: i32) -> (i32, i32, i32, i32) {
    %c0_i32 = arith.constant 0 : i32
    %c0_i32_0 = arith.constant 0 : i32
    return %arg0, %arg1, %arg2, %c0_i32 : i32, i32, i32, i32
  }
}

</mosaic_0001>

<llo_original>
// kernel: tpu_custom_call.1
$region0: #{tpu_custom_call.1}
  #allocation0 [shape = 'u32[]', space=smem, size = 0x4, offset = 0x4, fixed_abs, tag = 'smem constant byte address 0x4 - core index']
  #allocation1 [shape = 'u32[72,128]{1,0:T(1,128)}', space=vmem, size = 0x9000, scoped, tag = 'internal scratch']
  %s0 = inlined_call_operand.hbm [shape: f32[2,4,8,32], index: 0, kind: input, shape index: {}]
  %s1 = inlined_call_operand.hbm [shape: f32[2,4,8,32], index: 1, kind: input, shape index: {}]
  %s2 = inlined_call_operand.hbm [shape: f32[2,4,8,32], index: 2, kind: input, shape index: {}]
  %s3 = inlined_call_operand.hbm [shape: f32[2,4,8,32], index: 3, kind: output, shape index: {0}]
  %s4 = inlined_call_operand.hbm [shape: f32[2,4,8,8], index: 4, kind: output, shape index: {1}]
  %5 = xla_tuple %s3, %s4
  %s6 = sld [smem:[#allocation0]]
  $region65: #{tpu_custom_call.1} parent=0
    _
  %s8 = ssub.s32 1, %s6
  %s9 = scalar_select 0, %s8, %s6
  $region1: #{tpu_custom_call.1} parent=0
    #allocation2 [shape = 'u8[8192]{0}', space=vmem, size = 0x2000, scoped, tag = 'input window, operand 0']
    #allocation3 [shape = 's32[2]{0}', space=sflag, size = 0x8, scoped, tag = 'scoped memory for tpu_custom_call.1']
    #allocation4 [shape = 's32[2]{0}', space=sflag, size = 0x8, scoped, tag = 'scoped memory for tpu_custom_call.1']
    #allocation5 [shape = 'u8[8192]{0}', space=vmem, size = 0x2000, scoped, tag = 'input window, operand 1']
    #allocation6 [shape = 's32[2]{0}', space=sflag, size = 0x8, scoped, tag = 'scoped memory for tpu_custom_call.1']
    #allocation7 [shape = 'u8[8192]{0}', space=vmem, size = 0x2000, scoped, tag = 'input window, operand 2']
    #allocation8 [shape = 'u8[8192]{0}', space=vmem, size = 0x2000, scoped, tag = 'output window, operand 0']
    #allocation9 [shape = 'u8[8192]{0}', space=vmem, size = 0x2000, scoped, tag = 'output window, operand 1']
    #allocation10 [shape = 's32[2]{0}', space=sflag, size = 0x8, scoped, tag = 'scoped memory for tpu_custom_call.1']
    %10 = vsyncpa [#allocation3], 0
    %s11 = scalar_lea.sflag [#allocation3], 1
    %12 = vsyncpa %s11, 0
    %13 = vsyncpa [#allocation6], 0
    %s14 = scalar_lea.sflag [#allocation6], 1
    %15 = vsyncpa %s14, 0
    %16 = vsyncpa [#allocation4], 0
    %s17 = scalar_lea.sflag [#allocation4], 1
    %18 = vsyncpa %s17, 0
    %19 = vsyncpa [#allocation10], 0
    %s20 = scalar_lea.sflag [#allocation10], 1
    %21 = vsyncpa %s20, 0
    loop: start=0, step=1, limit=10
    $region2: #{tpu_custom_call.1} parent=1 // loop_pre_header
      _
    $region3: #{tpu_custom_call.1} parent=1 // loop_header
      %s23 = sphi 0, %s27
      %p24 = scmp.ge.s32.totalorder %s23, 10
      %s30 = sphi 0, %s49
      %s31 = sphi 0, %s45
      %s32 = sphi 0, %s41
      %s33 = sphi 0, %s30
      %s34 = sphi 0, %s31
      %s35 = sphi 0, %s32
      %s36 = sphi 0, %s33
      %s37 = sphi 0, %s34
      %s38 = sphi 0, %s35
      %s56 = sphi 0, %s58
      %s59 = sphi 0, %s56
      %s60 = sphi 0, %s59
      %s76 = sphi 0, %s60
      %s84 = sphi 0, %s86
      %s87 = sphi 0, %s84
      %s88 = sphi 0, %s87
      %s104 = sphi 0, %s88
      %s112 = sphi 0, %s114
      %s115 = sphi 0, %s112
      %s116 = sphi 0, %s115
      %s132 = sphi 0, %s116
      %s142 = sphi 0, %s144
      %s145 = sphi 0, %s142
      %s146 = sphi 0, %s145
      %s162 = sphi 0, %s146
      %s172 = sphi 0, %s174
      %s175 = sphi 0, %s172
      %s176 = sphi 0, %s175
      %s192 = sphi 0, %s176
    $region4: #{tpu_custom_call.1} parent=1 // loop_header_branch
      %26 = sbr.rel (%p24) target = $region8
    $region5: #{tpu_custom_call.1} parent=1 // loop_body
      %s28 = ssub.s32 %s23, 1
      %s29 = ssub.s32 %s23, 2
      %s39 = sadd.s32 1, %s32
      %p40 = scmp.ge.s32.totalorder %s39, 1
      %s41 = scalar_select %p40, 0, %s39
      %s42 = sadd.s32 1, %s31
      %s43 = scalar_select %p40, %s42, %s31
      %p44 = scmp.ge.s32.totalorder %s43, 4
      %s45 = scalar_select %p44, 0, %s43
      %s46 = sadd.s32 1, %s30
      %s47 = scalar_select %p44, %s46, %s30
      %p48 = scmp.ge.s32.totalorder %s47, 2
      %s49 = scalar_select %p48, 0, %s47
      %s50 = ssub.s32 %s30, %s49
      %s51 = ssub.s32 %s31, %s45
      %s52 = sor.u32 %s50, %s51
      %s53 = ssub.s32 %s32, %s41
      %s54 = sor.u32 %s52, %s53
      %p55 = scmp.eq.s32.totalorder %s54, 0
      %s57 = sadd.s32 %s56, 1
      %s58 = scalar_select %p55, %s56, %s57
      %p61 = pneg %p55
      %p62 = scmp.eq.s32.totalorder %s23, 7
      %p63 = por %p61, %p62
      %p64 = scmp.ne.s32.totalorder %s56, %s59
      %p65 = scmp.eq.s32.totalorder %s23, 0
      %p66 = por %p64, %p65
      %p67 = scmp.ne.s32.totalorder %s56, %s59
      %p68 = scmp.eq.s32.totalorder %s28, 7
      %p69 = por %p67, %p68
      %p70 = scmp.ne.s32.totalorder %s59, %s60
      %p71 = scmp.eq.s32.totalorder %s28, 0
      %p72 = por %p70, %p71
      %p73 = scmp.ne.s32.totalorder %s59, %s60
      %p74 = scmp.eq.s32.totalorder %s29, 7
      %p75 = por %p73, %p74
      %p77 = scmp.ne.s32.totalorder %s60, %s76
      %p78 = scmp.eq.s32.totalorder %s29, 0
      %p79 = por %p77, %p78
      %s80 = ssub.s32 %s30, %s49
      %s81 = ssub.s32 %s31, %s45
      %s82 = sor.u32 %s80, %s81
      %p83 = scmp.eq.s32.totalorder %s82, 0
      %s85 = sadd.s32 %s84, 1
      %s86 = scalar_select %p83, %s84, %s85
      %p89 = pneg %p83
      %p90 = scmp.eq.s32.totalorder %s23, 7
      %p91 = por %p89, %p90
      %p92 = scmp.ne.s32.totalorder %s84, %s87
      %p93 = scmp.eq.s32.totalorder %s23, 0
      %p94 = por %p92, %p93
      %p95 = scmp.ne.s32.totalorder %s84, %s87
      %p96 = scmp.eq.s32.totalorder %s28, 7
      %p97 = por %p95, %p96
      %p98 = scmp.ne.s32.totalorder %s87, %s88
      %p99 = scmp.eq.s32.totalorder %s28, 0
      %p100 = por %p98, %p99
      %p101 = scmp.ne.s32.totalorder %s87, %s88
      %p102 = scmp.eq.s32.totalorder %s29, 7
      %p103 = por %p101, %p102
      %p105 = scmp.ne.s32.totalorder %s88, %s104
      %p106 = scmp.eq.s32.totalorder %s29, 0
      %p107 = por %p105, %p106
      %s108 = ssub.s32 %s30, %s49
      %s109 = ssub.s32 %s31, %s45
      %s110 = sor.u32 %s108, %s109
      %p111 = scmp.eq.s32.totalorder %s110, 0
      %s113 = sadd.s32 %s112, 1
      %s114 = scalar_select %p111, %s112, %s113
      %p117 = pneg %p111
      %p118 = scmp.eq.s32.totalorder %s23, 7
      %p119 = por %p117, %p118
      %p120 = scmp.ne.s32.totalorder %s112, %s115
      %p121 = scmp.eq.s32.totalorder %s23, 0
      %p122 = por %p120, %p121
      %p123 = scmp.ne.s32.totalorder %s112, %s115
      %p124 = scmp.eq.s32.totalorder %s28, 7
      %p125 = por %p123, %p124
      %p126 = scmp.ne.s32.totalorder %s115, %s116
      %p127 = scmp.eq.s32.totalorder %s28, 0
      %p128 = por %p126, %p127
      %p129 = scmp.ne.s32.totalorder %s115, %s116
      %p130 = scmp.eq.s32.totalorder %s29, 7
      %p131 = por %p129, %p130
      %p133 = scmp.ne.s32.totalorder %s116, %s132
      %p134 = scmp.eq.s32.totalorder %s29, 0
      %p135 = por %p133, %p134
      %s136 = ssub.s32 %s30, %s49
      %s137 = ssub.s32 %s31, %s45
      %s138 = sor.u32 %s136, %s137
      %s139 = ssub.s32 %s32, %s41
      %s140 = sor.u32 %s138, %s139
      %p141 = scmp.eq.s32.totalorder %s140, 0
      %s143 = sadd.s32 %s142, 1
      %s144 = scalar_select %p141, %s142, %s143
      %p147 = pneg %p141
      %p148 = scmp.eq.s32.totalorder %s23, 7
      %p149 = por %p147, %p148
      %p150 = scmp.ne.s32.totalorder %s142, %s145
      %p151 = scmp.eq.s32.totalorder %s23, 0
      %p152 = por %p150, %p151
      %p153 = scmp.ne.s32.totalorder %s142, %s145
      %p154 = scmp.eq.s32.totalorder %s28, 7
      %p155 = por %p153, %p154
      %p156 = scmp.ne.s32.totalorder %s145, %s146
      %p157 = scmp.eq.s32.totalorder %s28, 0
      %p158 = por %p156, %p157
      %p159 = scmp.ne.s32.totalorder %s145, %s146
      %p160 = scmp.eq.s32.totalorder %s29, 7
      %p161 = por %p159, %p160
      %p163 = scmp.ne.s32.totalorder %s146, %s162
      %p164 = scmp.eq.s32.totalorder %s29, 0
      %p165 = por %p163, %p164
      %s166 = ssub.s32 %s30, %s49
      %s167 = ssub.s32 %s31, %s45
      %s168 = sor.u32 %s166, %s167
      %s169 = ssub.s32 %s32, %s41
      %s170 = sor.u32 %s168, %s169
      %p171 = scmp.eq.s32.totalorder %s170, 0
      %s173 = sadd.s32 %s172, 1
      %s174 = scalar_select %p171, %s172, %s173
      %p177 = pneg %p171
      %p178 = scmp.eq.s32.totalorder %s23, 7
      %p179 = por %p177, %p178
      %p180 = scmp.ne.s32.totalorder %s172, %s175
      %p181 = scmp.eq.s32.totalorder %s23, 0
      %p182 = por %p180, %p181
      %p183 = scmp.ne.s32.totalorder %s172, %s175
      %p184 = scmp.eq.s32.totalorder %s28, 7
      %p185 = por %p183, %p184
      %p186 = scmp.ne.s32.totalorder %s175, %s176
      %p187 = scmp.eq.s32.totalorder %s28, 0
      %p188 = por %p186, %p187
      %p189 = scmp.ne.s32.totalorder %s175, %s176
      %p190 = scmp.eq.s32.totalorder %s29, 7
      %p191 = por %p189, %p190
      %p193 = scmp.ne.s32.totalorder %s176, %s192
      %p194 = scmp.eq.s32.totalorder %s29, 0
      %p195 = por %p193, %p194
      %p196 = scmp.le.s32.totalorder 1, %s23
      %p197 = scmp.lt.s32.totalorder %s23, 9
      %p198 = pnand %p196, %p197
      %p199 = pneg %p198
      // Predicated region
      $region9: #{tpu_custom_call.1} parent=5 // pred_check
        _
      $region10: #{tpu_custom_call.1} parent=5 // pred_check_branch
        %201 = sbr.rel (%p198) target = $region12
      $region11: #{tpu_custom_call.1} parent=5 // pred_region
        %s202 = ssub.s32 %s23, 1
      $region12: #{tpu_custom_call.1} parent=5 // pred_fallthru
        _
      %p203 = scmp.lt.s32.totalorder %s23, 8
      // Predicated region
      $region13: #{tpu_custom_call.1} parent=5 // pred_check
        %p204 = pneg %p203
      $region14: #{tpu_custom_call.1} parent=5 // pred_check_branch
        %206 = sbr.rel (%p204) target = $region16
      $region15: #{tpu_custom_call.1} parent=5 // pred_region
        // Predicated region
        $region17: #{tpu_custom_call.1} parent=15 // pred_check
          %p207 = pneg %p66
        $region18: #{tpu_custom_call.1} parent=15 // pred_check_branch
          %209 = sbr.rel (%p207) target = $region20
        $region19: #{tpu_custom_call.1} parent=15 // pred_region
          %s210 = sand.u32 %s56, 1
          %s211 = scalar_lea.sflag [#allocation3], %s210
          %s212 = sand.u32 %s56, 1
          %s213 = smul.addr %s212, 8
          %s214 = scalar_lea.vmem [#allocation2], %s213
          %216 = vsyncadd %s211, 0
          %s217 = sadd.s32 %s32, %s31
          %s218 = smul.addr %s30, 4
          %s219 = sadd.s32 %s217, %s218
          %s220 = smul.addr %s219, 8
          %s221 = scalar_lea.hbm %s0, %s220
          %s223 = sshll.u32 %s221, 4
          %s224 = int_to_ptr.hbm [resolvable:$true] %s223
          %s225 = sshll.u32 %s214, 4
          %s226 = int_to_ptr.vmem [resolvable:$true] %s225
          %228 = dma.hbm_to_vmem [thread:$0]  %s224, 128, %s226, %s211
        $region20: #{tpu_custom_call.1} parent=15 // pred_fallthru
          _
        // Predicated region
        $region21: #{tpu_custom_call.1} parent=15 // pred_check
          %p229 = pneg %p94
        $region22: #{tpu_custom_call.1} parent=15 // pred_check_branch
          %231 = sbr.rel (%p229) target = $region24
        $region23: #{tpu_custom_call.1} parent=15 // pred_region
          %s232 = sand.u32 %s23, 1
          %s233 = scalar_lea.sflag [#allocation6], %s232
          %s234 = sand.u32 %s84, 1
          %s235 = smul.addr %s234, 8
          %s236 = scalar_lea.vmem [#allocation5], %s235
          %238 = vsyncadd %s233, 0
          %s239 = smul.addr %s30, 4
          %s240 = sadd.s32 %s31, %s239
          %s241 = smul.addr %s240, 8
          %s242 = scalar_lea.hbm %s1, %s241
          %s244 = sshll.u32 %s242, 4
          %s245 = int_to_ptr.hbm [resolvable:$true] %s244
          %s246 = sshll.u32 %s236, 4
          %s247 = int_to_ptr.vmem [resolvable:$true] %s246
          %249 = dma.hbm_to_vmem [thread:$0]  %s245, 128, %s247, %s233
        $region24: #{tpu_custom_call.1} parent=15 // pred_fallthru
          _
        // Predicated region
        $region25: #{tpu_custom_call.1} parent=15 // pred_check
          %p250 = pneg %p122
        $region26: #{tpu_custom_call.1} parent=15 // pred_check_branch
          %252 = sbr.rel (%p250) target = $region28
        $region27: #{tpu_custom_call.1} parent=15 // pred_region
          %s253 = sand.u32 %s23, 1
          %s254 = scalar_lea.sflag [#allocation6], %s253
          %s255 = sand.u32 %s112, 1
          %s256 = smul.addr %s255, 8
          %s257 = scalar_lea.vmem [#allocation7], %s256
          %259 = vsyncadd %s254, 0
          %s260 = smul.addr %s30, 4
          %s261 = sadd.s32 %s31, %s260
          %s262 = smul.addr %s261, 8
          %s263 = scalar_lea.hbm %s2, %s262
          %s265 = sshll.u32 %s263, 4
          %s266 = int_to_ptr.hbm [resolvable:$true] %s265
          %s267 = sshll.u32 %s257, 4
          %s268 = int_to_ptr.vmem [resolvable:$true] %s267
          %270 = dma.hbm_to_vmem [thread:$0]  %s266, 128, %s268, %s254
        $region28: #{tpu_custom_call.1} parent=15 // pred_fallthru
          _
      $region16: #{tpu_custom_call.1} parent=5 // pred_fallthru
        _
      %p271 = scmp.le.s32.totalorder 1, %s23
      %p272 = scmp.lt.s32.totalorder %s23, 9
      %p273 = pnand %p271, %p272
      %p274 = pneg %p273
      // Predicated region
      $region29: #{tpu_custom_call.1} parent=5 // pred_check
        _
      $region30: #{tpu_custom_call.1} parent=5 // pred_check_branch
        %276 = sbr.rel (%p273) target = $region32
      $region31: #{tpu_custom_call.1} parent=5 // pred_region
        %s277 = ssub.s32 %s23, 1
        %s278 = sand.u32 %s59, 1
        %s279 = scalar_lea.sflag [#allocation3], %s278
        %s280 = sand.u32 %s59, 1
        %s281 = smul.addr %s280, 8
        %s282 = scalar_lea.vmem [#allocation2], %s281
        // Predicated region
        $region33: #{tpu_custom_call.1} parent=31 // pred_check
          %p283 = pneg %p72
        $region34: #{tpu_custom_call.1} parent=31 // pred_check_branch
          %285 = sbr.rel (%p283) target = $region36
        $region35: #{tpu_custom_call.1} parent=31 // pred_region
          %287 = dma.done %s279, 128
        $region36: #{tpu_custom_call.1} parent=31 // pred_fallthru
          _
        %s288 = sand.u32 %s28, 1
        %s289 = scalar_lea.sflag [#allocation6], %s288
        %s290 = sand.u32 %s87, 1
        %s291 = smul.addr %s290, 8
        %s292 = scalar_lea.vmem [#allocation5], %s291
        // Predicated region
        $region37: #{tpu_custom_call.1} parent=31 // pred_check
          %p293 = pneg %p100
        $region38: #{tpu_custom_call.1} parent=31 // pred_check_branch
          %295 = sbr.rel (%p293) target = $region40
        $region39: #{tpu_custom_call.1} parent=31 // pred_region
          %297 = dma.done %s289, 128
        $region40: #{tpu_custom_call.1} parent=31 // pred_fallthru
          _
        %s298 = sand.u32 %s28, 1
        %s299 = scalar_lea.sflag [#allocation6], %s298
        %s300 = sand.u32 %s115, 1
        %s301 = smul.addr %s300, 8
        %s302 = scalar_lea.vmem [#allocation7], %s301
        // Predicated region
        $region41: #{tpu_custom_call.1} parent=31 // pred_check
          %p303 = pneg %p128
        $region42: #{tpu_custom_call.1} parent=31 // pred_check_branch
          %305 = sbr.rel (%p303) target = $region44
        $region43: #{tpu_custom_call.1} parent=31 // pred_region
          %307 = dma.done %s299, 128
        $region44: #{tpu_custom_call.1} parent=31 // pred_fallthru
          _
        %s308 = sand.u32 %s59, 1
        %s309 = scalar_lea.sflag [#allocation3], %s308
        %s310 = sand.u32 %s59, 1
        %s311 = smul.addr %s310, 8
        %s312 = scalar_lea.vmem [#allocation2], %s311
        %p313 = pneg %p72
        %p314 = pneg %p69
        %s315 = sand.u32 %s28, 1
        %s316 = scalar_lea.sflag [#allocation6], %s315
        %s317 = sand.u32 %s87, 1
        %s318 = smul.addr %s317, 8
        %s319 = scalar_lea.vmem [#allocation5], %s318
        %p320 = pneg %p100
        %p321 = pneg %p97
        %s322 = sand.u32 %s28, 1
        %s323 = scalar_lea.sflag [#allocation6], %s322
        %s324 = sand.u32 %s115, 1
        %s325 = smul.addr %s324, 8
        %s326 = scalar_lea.vmem [#allocation7], %s325
        %p327 = pneg %p128
        %p328 = pneg %p125
        %p329 = pneg %p158
        %p330 = pneg %p155
        %s331 = sand.u32 %s145, 1
        %s332 = scalar_lea.sflag [#allocation4], %s331
        %s333 = sand.u32 %s145, 1
        %s334 = smul.addr %s333, 8
        %s335 = scalar_lea.vmem [#allocation8], %s334
        %p336 = pneg %p188
        %p337 = pneg %p185
        %s338 = sand.u32 %s175, 1
        %s339 = scalar_lea.sflag [#allocation10], %s338
        %s340 = sand.u32 %s175, 1
        %s341 = smul.addr %s340, 8
        %s342 = scalar_lea.vmem [#allocation9], %s341
        %v343 = vld [vmem:[%s282] sm:$0xff]
        %v344 = vmul.f32 %v343, 0.17677669
        %v345 = vld [vmem:[%s292] sm:$0xff]
        %v346 = vld [vmem:[%s302] sm:$0xff]
        %vm347 = vcmask 261120
        %v349 = vsel %vm347, %v344, 0
        %v352 = vsel %vm347, %v345, 0
        %354 = vmatpush.xpose.msra.mxu0 0.0
        %355 = vmatpush.xpose.msra.mxu0 0.0
        %356 = vmatpush.xpose.msra.mxu0 0.0
        %357 = vmatpush.xpose.msra.mxu0 0.0
        %358 = vmatpush.xpose.msra.mxu0 0.0
        %359 = vmatpush.xpose.msra.mxu0 0.0
        %360 = vmatpush.xpose.msra.mxu0 0.0
        %361 = vmatpush.xpose.msra.mxu0 0.0
        %362 = vmatpush.xpose.msra.mxu0 0.0
        %363 = vmatpush.xpose.msra.mxu0 0.0
        %364 = vmatpush.xpose.msra.mxu0 0.0
        %365 = vmatpush.xpose.msra.mxu0 0.0
        %366 = vmatpush.xpose.msra.mxu0 0.0
        %367 = vmatpush.xpose.msra.mxu0 0.0
        %368 = vmatpush.xpose.msra.mxu0 0.0
        %369 = vmatpush.xpose.msra.mxu0 %v352
        %370 = vmatmul.f32.gmra.mxu0 %v349
        %v371 = vpop.f32.mrf.mxu0
        %v372 = vadd.f32 0.0, %v371
        %373 = vdwg.mxu0
        %vm374 = vcmask 64512
        %v375 = vsel %vm374, %v372, -inf
        %376 = vmax.xlane.f32.xlu0 %v375
        %v377 = vpop.xlane.xlu0 %376
        %v378 = vsub.f32 %v372, %v377
        %v379 = vmul.f32 %v378, 1.442695
        %v380 = vpow.pop %v379
        %v381 = vsel %vm374, %v380, 0.0
        %382 = vadd.xlane.f32.xlu0 %v381
        %v383 = vpop.xlane.xlu0 %382
        %v384 = vrcp.pop %v383
        %v385 = vmul.f32 %v383, %v384
        %v386 = vsub.f32 1.0, %v385
        %v387 = vmul.f32 %v384, %v386
        %v388 = vadd.f32 %v384, %v387
        %vm389 = vweird.f32 %v383
        %vm390 = vweird.f32 %v384
        %vm391 = vmor %vm389, %vm390
        %v392 = vsel %vm391, %v384, %v388
        %v393 = vand.u32 2147483647, %v383
        %vm394 = vcmp.eq.f32.partialorder %v393, 8.507059e+37
        %v395 = vand.u32 %v383, 2147483648
        %v396 = vor.u32 1.1754944e-38, %v395
        %v397 = vsel %vm394, %v396, %v392
        %v398 = vmul.f32 1.0, %v397
        %v399 = vmul.f32 %v380, %v398
        %v401 = vsel %vm374, %v399, 0
        %403 = vmatpush.msra.mxu0 0.0
        %404 = vmatpush.msra.mxu0 0.0
        %405 = vmatpush.msra.mxu0 0.0
        %406 = vmatpush.msra.mxu0 0.0
        %407 = vmatpush.msra.mxu0 0.0
        %408 = vmatpush.msra.mxu0 0.0
        %409 = vmatpush.msra.mxu0 0.0
        %410 = vmatpush.msra.mxu0 0.0
        %411 = vmatpush.msra.mxu0 0.0
        %412 = vmatpush.msra.mxu0 0.0
        %413 = vmatpush.msra.mxu0 0.0
        %414 = vmatpush.msra.mxu0 0.0
        %415 = vmatpush.msra.mxu0 0.0
        %416 = vmatpush.msra.mxu0 0.0
        %417 = vmatpush.msra.mxu0 0.0
        %418 = vmatpush.msra.mxu0 %v346
        %419 = vmatmul.f32.gmra.mxu0 %v401
        %v420 = vpop.f32.mrf.mxu0
        %v421 = vadd.f32 0.0, %v420
        %422 = vdwg.mxu0
        %423 = vst.msk [vmem:[%s335] sm:$0xff] %vm347, %v421
        %424 = vst.msk [vmem:[%s342] sm:$0xff] %vm374, %v399
        %s425 = sand.u32 %s145, 1
        %s426 = scalar_lea.sflag [#allocation4], %s425
        %s427 = sand.u32 %s145, 1
        %s428 = smul.addr %s427, 8
        %s429 = scalar_lea.vmem [#allocation8], %s428
        %s430 = sand.u32 %s175, 1
        %s431 = scalar_lea.sflag [#allocation10], %s430
        %s432 = sand.u32 %s175, 1
        %s433 = smul.addr %s432, 8
        %s434 = scalar_lea.vmem [#allocation9], %s433
        // Predicated region
        $region45: #{tpu_custom_call.1} parent=31 // pred_check
          %p435 = pneg %p155
        $region46: #{tpu_custom_call.1} parent=31 // pred_check_branch
          %437 = sbr.rel (%p435) target = $region48
        $region47: #{tpu_custom_call.1} parent=31 // pred_region
          %439 = vsyncadd %s426, 0
          %s440 = sadd.s32 %s35, %s34
          %s441 = smul.addr %s33, 4
          %s442 = sadd.s32 %s440, %s441
          %s443 = smul.addr %s442, 8
          %s444 = scalar_lea.hbm %s3, %s443
          %s446 = sshll.u32 %s429, 4
          %s447 = int_to_ptr.vmem [resolvable:$true] %s446
          %s448 = sshll.u32 %s444, 4
          %s449 = int_to_ptr.hbm [resolvable:$true] %s448
          %451 = dma.vmem_to_hbm [thread:$0]  %s447, 128, %s449, %s426
        $region48: #{tpu_custom_call.1} parent=31 // pred_fallthru
          _
        // Predicated region
        $region49: #{tpu_custom_call.1} parent=31 // pred_check
          %p452 = pneg %p185
        $region50: #{tpu_custom_call.1} parent=31 // pred_check_branch
          %454 = sbr.rel (%p452) target = $region52
        $region51: #{tpu_custom_call.1} parent=31 // pred_region
          %456 = vsyncadd %s431, 0
          %s457 = sadd.s32 %s35, %s34
          %s458 = smul.addr %s33, 4
          %s459 = sadd.s32 %s457, %s458
          %s460 = smul.addr %s459, 8
          %s461 = scalar_lea.hbm %s4, %s460
          %s463 = sshll.u32 %s434, 4
          %s464 = int_to_ptr.vmem [resolvable:$true] %s463
          %s465 = sshll.u32 %s461, 4
          %s466 = int_to_ptr.hbm [resolvable:$true] %s465
          %468 = dma.vmem_to_hbm [thread:$0]  %s464, 128, %s466, %s431
        $region52: #{tpu_custom_call.1} parent=31 // pred_fallthru
          _
      $region32: #{tpu_custom_call.1} parent=5 // pred_fallthru
        _
      %p469 = scmp.le.s32.totalorder 2, %s23
      // Predicated region
      $region53: #{tpu_custom_call.1} parent=5 // pred_check
        %p470 = pneg %p469
      $region54: #{tpu_custom_call.1} parent=5 // pred_check_branch
        %472 = sbr.rel (%p470) target = $region56
      $region55: #{tpu_custom_call.1} parent=5 // pred_region
        %s473 = ssub.s32 %s23, 2
        // Predicated region
        $region57: #{tpu_custom_call.1} parent=55 // pred_check
          %p474 = pneg %p161
        $region58: #{tpu_custom_call.1} parent=55 // pred_check_branch
          %476 = sbr.rel (%p474) target = $region60
        $region59: #{tpu_custom_call.1} parent=55 // pred_region
          %s477 = sand.u32 %s146, 1
          %s478 = scalar_lea.sflag [#allocation4], %s477
          %s479 = sand.u32 %s146, 1
          %s480 = smul.addr %s479, 8
          %s481 = scalar_lea.vmem [#allocation8], %s480
          %483 = dma.done %s478, 128
        $region60: #{tpu_custom_call.1} parent=55 // pred_fallthru
          _
        // Predicated region
        $region61: #{tpu_custom_call.1} parent=55 // pred_check
          %p484 = pneg %p191
        $region62: #{tpu_custom_call.1} parent=55 // pred_check_branch
          %486 = sbr.rel (%p484) target = $region64
        $region63: #{tpu_custom_call.1} parent=55 // pred_region
          %s487 = sand.u32 %s176, 1
          %s488 = scalar_lea.sflag [#allocation10], %s487
          %s489 = sand.u32 %s176, 1
          %s490 = smul.addr %s489, 8
          %s491 = scalar_lea.vmem [#allocation9], %s490
          %493 = dma.done %s488, 128
        $region64: #{tpu_custom_call.1} parent=55 // pred_fallthru
          _
      $region56: #{tpu_custom_call.1} parent=5 // pred_fallthru
        _
    $region6: #{tpu_custom_call.1} parent=1 // loop_footer
      %s27 = sadd.s32 1, %s23
    $region7: #{tpu_custom_call.1} parent=1 // loop_footer_branch
      %22 = sbr.rel target = $region3
    $region8: #{tpu_custom_call.1} parent=1 // loop_exit
      _
    %494 = vsyncpa [#allocation3], 1
    %s495 = scalar_lea.sflag [#allocation3], 1
    %496 = vsyncpa %s495, 1
    %497 = vsyncpa [#allocation6], 1
    %s498 = scalar_lea.sflag [#allocation6], 1
    %499 = vsyncpa %s498, 1
    %500 = vsyncpa [#allocation4], 1
    %s501 = scalar_lea.sflag [#allocation4], 1
    %502 = vsyncpa %s501, 1
    %503 = vsyncpa [#allocation10], 1
    %s504 = scalar_lea.sflag [#allocation10], 1
    %505 = vsyncpa %s504, 1

</llo_original>
